<compile_context>
chip_gen: v7x
topology: tpu7x:2x2x1
jax: 0.10.0
libtpu: 0.0.40
codegen_flags: <defaults>
</compile_context>

<pallas_src>
import functools

import numpy as np
import jax
import jax.numpy as jnp
from jax import lax
from jax.experimental import pallas as pl
from jax.experimental.pallas import tpu as pltpu

_NEG_BIG = -1e30                 # bias pad value for class lanes beyond dimR (keep f32!)
_VMEM_LIMIT = 32 * 1024 * 1024   # explicit scoped-VMEM limit (safe on v5e/v6e/v7x)
_BLOCK_BUDGET = 24 * 1024 * 1024 # what the blocked operands may use (headroom kept)


def _round_up(x, m):
    return ((x + m - 1) // m) * m


def _pick_batch_block(B, L, C, RP):
    """Largest 8-multiple batch block whose double-buffered VMEM fits the budget."""
    per_row = (2 * (L * C * 2        # hid block, bf16, double-buffered
                    + 3 * L * 4      # stacked (3,.,L,1) masks, f32
                    + 1 * 4          # label, int32
                    + RP * 4)        # packed output, f32
               + L * C * 4)          # in-kernel f32 upcast working copy (single)
    bb = _BLOCK_BUDGET // max(per_row, 1)
    bb = int(max(8, min(bb, 512)))
    bb = (bb // 8) * 8               # multiple of 8 sublanes -> unmasked stores
    bb = min(bb, _round_up(B, 8))    # don't over-pad tiny batches
    return bb


def _disc_kernel(hid_ref, masks_ref, wt_ref, b_ref, lab_ref, out_ref, *,
                 num_classes):
    # Single upcast of the dominant stream: bf16 storage, f32 math (v5e-safe).
    hid = hid_ref[...].astype(jnp.float32)            # (Bb, L, C)
    Bb = hid.shape[0]
    RP = wt_ref.shape[1]                              # padded class lanes (mult of 128)

    # DMCNN dynamic-pooling branch.  The original's +1 before the max-pool and
    # the -1 after it cancel, so this is tanh(max_over_L(conved * mask)).
    # TODO(synk): dropout(p=keepProb) treated as eval-mode identity.
    def pooled_rep(i):
        m = masks_ref[i]                              # (Bb, L, 1) -> lane splat over C
        return jnp.tanh(jnp.max(hid * m, axis=1))     # (Bb, C)

    # Single fused MXU push on the concatenated representation (3C lanes).
    rep = jnp.concatenate([pooled_rep(0), pooled_rep(1), pooled_rep(2)],
                          axis=1)                     # (Bb, 3C)
    logits = (jnp.dot(rep, wt_ref[...], preferred_element_type=jnp.float32)
              + b_ref[...])                           # (Bb, RP); padded lanes ~ -1e30

    # softmax(dim=1); padded lanes underflow to exactly 0 in f32.
    mx = jnp.max(logits, axis=1, keepdims=True)
    ex = jnp.exp(logits - mx)
    sm = jnp.sum(ex, axis=1, keepdims=True)
    scores = ex / sm                                  # exact divide (module output)

    # CrossEntropyLoss per-example term: logsumexp(logits) - logits[label].
    col = lax.broadcasted_iota(jnp.int32, (Bb, RP), 1)
    onehot = (col == lab_ref[...]).astype(jnp.float32)          # lab: (Bb, 1) int32
    picked = jnp.sum(logits * onehot, axis=1, keepdims=True)
    per_loss = (mx + jnp.log(sm)) - picked                      # (Bb, 1)

    # torch.max(scores, dim=1) -> (values, first-max indices).
    maxv = jnp.max(scores, axis=1, keepdims=True)
    predi = jnp.min(jnp.where(scores == maxv, col, RP), axis=1, keepdims=True)

    # Pack everything into one lane-dense slab (single unmasked store / DMA).
    packed = scores
    packed = jnp.where(col == num_classes, per_loss, packed)
    packed = jnp.where(col == num_classes + 1, maxv, packed)
    # NOTE: pred index round-trips through f32 -> exact only for dimR < 2**24.
    packed = jnp.where(col == num_classes + 2, predi.astype(jnp.float32), packed)
    out_ref[...] = packed


def discriminator_forward(inp, inMask, maskL, maskM, maskR, label, params):
    """Returns (loss, scores, (pred_values, pred_indices)) like the torch module."""
    # TODO(synk): pretrained BertModel replaced by a deterministic token embedding;
    #             inMask (attention mask) is unused by the synthetic encoder.
    del inMask
    # bf16 storage for the dominant (B, L, C) stream; f32 math inside the kernel.
    hid = jnp.take(params["emb"], inp, axis=0).astype(jnp.bfloat16)   # (B, L, C)
    B, L, C = hid.shape
    R = params["W"].shape[0]                          # dimR
    RP = 128 * pl.cdiv(R + 3, 128)                    # lane-dense padded width

    Bb = _pick_batch_block(B, L, C, RP)
    B_pad = Bb * pl.cdiv(B, Bb)
    pb = B_pad - B

    # One stacked mask array; broadcast axis kept last so the in-kernel
    # C-broadcast is a lane splat rather than a lane->sublane relayout.
    masks = jnp.stack([maskL, maskM, maskR], axis=0).astype(jnp.float32)[..., None]
    lab = label.astype(jnp.int32)[:, None]            # (B, 1)
    if pb:
        hid = jnp.pad(hid, ((0, pb), (0, 0), (0, 0)))
        masks = jnp.pad(masks, ((0, 0), (0, pb), (0, 0), (0, 0)))
        lab = jnp.pad(lab, ((0, pb), (0, 0)))

    # W^T zero-padded to RP class lanes; bias padded with -1e30 (f32) so padded
    # logits never win the softmax / max / argmax.
    wt_p = jnp.pad(params["W"].T.astype(jnp.float32), ((0, 0), (0, RP - R)))
    b_p = jnp.pad(params["b"].astype(jnp.float32)[None, :], ((0, 0), (0, RP - R)),
                  constant_values=_NEG_BIG)

    grid = (B_pad // Bb,)
    packed = pl.pallas_call(
        functools.partial(_disc_kernel, num_classes=R),
        out_shape=jax.ShapeDtypeStruct((B_pad, RP), jnp.float32),
        grid_spec=pltpu.PrefetchScalarGridSpec(
            num_scalar_prefetch=0,
            grid=grid,
            in_specs=[
                pl.BlockSpec((Bb, L, C), lambda b: (b, 0, 0)),       # hid (bf16)
                pl.BlockSpec((3, Bb, L, 1), lambda b: (0, b, 0, 0)), # stacked masks
                pl.BlockSpec((3 * C, RP), lambda b: (0, 0)),         # W^T (resident)
                pl.BlockSpec((1, RP), lambda b: (0, 0)),             # bias (resident)
                pl.BlockSpec((Bb, 1), lambda b: (b, 0)),             # labels
            ],
            out_specs=pl.BlockSpec((Bb, RP), lambda b: (b, 0)),
        ),
        compiler_params=pltpu.CompilerParams(
            dimension_semantics=("parallel",),        # v7x: shard batch over 2 TCs
            vmem_limit_bytes=_VMEM_LIMIT,
        ),
    )(hid, masks, wt_p, b_p, lab)

    scores = packed[:B, :R]
    loss = jnp.mean(packed[:B, R])
    predv = packed[:B, R + 1]
    predi = packed[:B, R + 2].astype(jnp.int32)
    return loss, scores, (predv, predi)


def _reference(inp, maskL, maskM, maskR, label, params):
    # Mirror the kernel's bf16 storage policy for the hidden states so the
    # comparison exercises the kernel math, not the dtype decision.
    hid = jnp.take(params["emb"], inp, axis=0).astype(jnp.bfloat16).astype(jnp.float32)

    def pool(m):
        return jnp.max(hid * m[:, :, None] + 1.0, axis=1)

    pooled = jnp.concatenate([pool(maskL), pool(maskM), pool(maskR)], axis=1) - 1.0
    rep = jnp.tanh(pooled)
    logits = rep @ params["W"].T + params["b"]
    scores = jax.nn.softmax(logits, axis=1)
    lse = jax.scipy.special.logsumexp(logits, axis=1)
    picked = jnp.take_along_axis(logits, label[:, None], axis=1)[:, 0]
    loss = jnp.mean(lse - picked)
    return loss, scores, jnp.max(scores, axis=1), jnp.argmax(scores, axis=1)


if __name__ == "__main__":
    # Small synthetic shapes: SZ=2, SenLen=8, dimC=32, dimR=4, vocab=50
    SZ, SenLen, dimC, dimR, vocab = 2, 8, 32, 4, 50

    key = jax.random.PRNGKey(0)
    k_emb, k_w, k_b, k_inp, k_lab, k_trig = jax.random.split(key, 6)

    params = {
        "emb": 0.02 * jax.random.normal(k_emb, (vocab, dimC), jnp.float32),
        "W":   0.05 * jax.random.normal(k_w, (dimR, 3 * dimC), jnp.float32),
        "b":   0.01 * jax.random.normal(k_b, (dimR,), jnp.float32),
    }

    inp = jax.random.randint(k_inp, (SZ, SenLen), 0, vocab, jnp.int32)
    inMask = jnp.ones((SZ, SenLen), jnp.float32)
    label = jax.random.randint(k_lab, (SZ,), 0, dimR, jnp.int32)

    # DMCNN-style position masks: positions split around a trigger index.
    trig = jax.random.randint(k_trig, (SZ, 1), 1, SenLen - 1, jnp.int32)
    pos = jnp.arange(SenLen)[None, :]
    maskL = (pos < trig).astype(jnp.float32)
    maskM = (pos == trig).astype(jnp.float32)
    maskR = (pos > trig).astype(jnp.float32)

    loss, scores, (pvals, pidx) = discriminator_forward(
        inp, inMask, maskL, maskM, maskR, label, params)
    jax.block_until_ready((loss, scores, pvals, pidx))

    # Sanity check against a pure-JAX reference.
    rloss, rscores, rpvals, rpidx = _reference(inp, maskL, maskM, maskR, label, params)
    np.testing.assert_allclose(np.asarray(loss), np.asarray(rloss), rtol=1e-3, atol=1e-3)
    np.testing.assert_allclose(np.asarray(scores), np.asarray(rscores), rtol=2e-3, atol=2e-3)
    np.testing.assert_allclose(np.asarray(pvals), np.asarray(rpvals), rtol=2e-3, atol=2e-3)
    np.testing.assert_array_equal(np.asarray(pidx), np.asarray(rpidx))

    print("KERNEL_OK")
</pallas_src>

<mosaic_0001>
module attributes {stable_mosaic.version = 11 : i64} {
  func.func @_disc_kernel(%arg0: i32, %arg1: memref<8x8x32xbf16, #tpu.memory_space<vmem>>, %arg2: memref<3x8x8x1xf32, #tpu.memory_space<vmem>>, %arg3: memref<96x128xf32, #tpu.memory_space<vmem>>, %arg4: memref<1x128xf32, #tpu.memory_space<vmem>>, %arg5: memref<8x1xi32, #tpu.memory_space<vmem>>, %arg6: memref<8x128xf32, #tpu.memory_space<vmem>>) attributes {dimension_semantics = [#tpu.dimension_semantics<parallel>], iteration_bounds = array<i64: 1>, scalar_prefetch = 0 : i64, scratch_operands = 0 : i64, tpu.core_type = #tpu.core_type<tc>, window_params = [{transform_indices = @transform_0, window_bounds = array<i64: 8, 8, 32>}, {transform_indices = @transform_1, window_bounds = array<i64: 3, 8, 8, 1>}, {pipeline_mode = #tpu.pipeline_mode<synchronous>, transform_indices = @transform_2, window_bounds = array<i64: 96, 128>}, {pipeline_mode = #tpu.pipeline_mode<synchronous>, transform_indices = @transform_3, window_bounds = array<i64: 1, 128>}, {transform_indices = @transform_4, window_bounds = array<i64: 8, 1>}, {transform_indices = @transform_5, window_bounds = array<i64: 8, 128>}]} {
    %c0 = arith.constant 0 : index
    %c0_0 = arith.constant 0 : index
    %c0_1 = arith.constant 0 : index
    %0 = vector.load %arg1[%c0, %c0_0, %c0_1] : memref<8x8x32xbf16, #tpu.memory_space<vmem>>, vector<8x8x32xbf16>
    %1 = arith.extf %0 : vector<8x8x32xbf16> to vector<8x8x32xf32>
    %c0_2 = arith.constant 0 : index
    %c0_3 = arith.constant 0 : index
    %c0_4 = arith.constant 0 : index
    %c0_5 = arith.constant 0 : index
    %2 = vector.load %arg2[%c0_2, %c0_3, %c0_4, %c0_5] : memref<3x8x8x1xf32, #tpu.memory_space<vmem>>, vector<1x8x8x1xf32>
    %3 = vector.shape_cast %2 : vector<1x8x8x1xf32> to vector<8x8x1xf32>
    %4 = vector.broadcast %3 : vector<8x8x1xf32> to vector<8x8x32xf32>
    %5 = arith.mulf %1, %4 : vector<8x8x32xf32>
    %cst = arith.constant dense<0xFF800000> : vector<8x32xf32>
    %6 = vector.multi_reduction <maximumf>, %5, %cst [1] : vector<8x8x32xf32> to vector<8x32xf32>
    %7 = math.tanh %6 : vector<8x32xf32>
    %c1 = arith.constant 1 : index
    %c0_6 = arith.constant 0 : index
    %c0_7 = arith.constant 0 : index
    %c0_8 = arith.constant 0 : index
    %8 = vector.load %arg2[%c1, %c0_6, %c0_7, %c0_8] : memref<3x8x8x1xf32, #tpu.memory_space<vmem>>, vector<1x8x8x1xf32>
    %9 = vector.shape_cast %8 : vector<1x8x8x1xf32> to vector<8x8x1xf32>
    %10 = vector.broadcast %9 : vector<8x8x1xf32> to vector<8x8x32xf32>
    %11 = arith.mulf %1, %10 : vector<8x8x32xf32>
    %cst_9 = arith.constant dense<0xFF800000> : vector<8x32xf32>
    %12 = vector.multi_reduction <maximumf>, %11, %cst_9 [1] : vector<8x8x32xf32> to vector<8x32xf32>
    %13 = math.tanh %12 : vector<8x32xf32>
    %c2 = arith.constant 2 : index
    %c0_10 = arith.constant 0 : index
    %c0_11 = arith.constant 0 : index
    %c0_12 = arith.constant 0 : index
    %14 = vector.load %arg2[%c2, %c0_10, %c0_11, %c0_12] : memref<3x8x8x1xf32, #tpu.memory_space<vmem>>, vector<1x8x8x1xf32>
    %15 = vector.shape_cast %14 : vector<1x8x8x1xf32> to vector<8x8x1xf32>
    %16 = vector.broadcast %15 : vector<8x8x1xf32> to vector<8x8x32xf32>
    %17 = arith.mulf %1, %16 : vector<8x8x32xf32>
    %cst_13 = arith.constant dense<0xFF800000> : vector<8x32xf32>
    %18 = vector.multi_reduction <maximumf>, %17, %cst_13 [1] : vector<8x8x32xf32> to vector<8x32xf32>
    %19 = math.tanh %18 : vector<8x32xf32>
    %20 = tpu.concatenate %7, %13, %19 in 1 : vector<8x32xf32>, vector<8x32xf32>, vector<8x32xf32> -> vector<8x96xf32>
    %c0_14 = arith.constant 0 : index
    %c0_15 = arith.constant 0 : index
    %21 = vector.load %arg3[%c0_14, %c0_15] : memref<96x128xf32, #tpu.memory_space<vmem>>, vector<96x128xf32>
    %cst_16 = arith.constant dense<0.000000e+00> : vector<8x128xf32>
    %22 = tpu.matmul %20, %21, %cst_16 {dimension_numbers = #tpu.dot_dimension_numbers<[1], [0], [0], [1], [0, 0, 1, 1], [], []>} : vector<8x96xf32>, vector<96x128xf32>, vector<8x128xf32> -> vector<8x128xf32>
    %c0_17 = arith.constant 0 : index
    %c0_18 = arith.constant 0 : index
    %23 = vector.load %arg4[%c0_17, %c0_18] : memref<1x128xf32, #tpu.memory_space<vmem>>, vector<1x128xf32>
    %24 = vector.broadcast %23 : vector<1x128xf32> to vector<8x128xf32>
    %25 = arith.addf %22, %24 : vector<8x128xf32>
    %cst_19 = arith.constant dense<0xFF800000> : vector<8xf32>
    %26 = vector.multi_reduction <maximumf>, %25, %cst_19 [1] : vector<8x128xf32> to vector<8xf32>
    %27 = vector.shape_cast %26 : vector<8xf32> to vector<8x1xf32>
    %28 = vector.broadcast %27 : vector<8x1xf32> to vector<8x128xf32>
    %29 = arith.subf %25, %28 : vector<8x128xf32>
    %30 = math.exp %29 : vector<8x128xf32>
    %cst_20 = arith.constant dense<0.000000e+00> : vector<8xf32>
    %31 = vector.multi_reduction <add>, %30, %cst_20 [1] : vector<8x128xf32> to vector<8xf32>
    %32 = vector.shape_cast %31 : vector<8xf32> to vector<8x1xf32>
    %33 = vector.broadcast %32 : vector<8x1xf32> to vector<8x128xf32>
    %34 = arith.divf %30, %33 : vector<8x128xf32>
    %35 = tpu.iota {dimensions = array<i32: 1>} : vector<8x128xi32>
    %c0_21 = arith.constant 0 : index
    %c0_22 = arith.constant 0 : index
    %36 = vector.load %arg5[%c0_21, %c0_22] : memref<8x1xi32, #tpu.memory_space<vmem>>, vector<8x1xi32>
    %37 = vector.broadcast %36 : vector<8x1xi32> to vector<8x128xi32>
    %38 = arith.cmpi eq, %35, %37 : vector<8x128xi32>
    %39 = arith.extui %38 : vector<8x128xi1> to vector<8x128xi32>
    %40 = arith.sitofp %39 : vector<8x128xi32> to vector<8x128xf32>
    %41 = arith.mulf %25, %40 : vector<8x128xf32>
    %cst_23 = arith.constant dense<0.000000e+00> : vector<8xf32>
    %42 = vector.multi_reduction <add>, %41, %cst_23 [1] : vector<8x128xf32> to vector<8xf32>
    %43 = vector.shape_cast %42 : vector<8xf32> to vector<8x1xf32>
    %44 = math.log %32 : vector<8x1xf32>
    %45 = arith.addf %27, %44 : vector<8x1xf32>
    %46 = arith.subf %45, %43 : vector<8x1xf32>
    %cst_24 = arith.constant dense<0xFF800000> : vector<8xf32>
    %47 = vector.multi_reduction <maximumf>, %34, %cst_24 [1] : vector<8x128xf32> to vector<8xf32>
    %48 = vector.shape_cast %47 : vector<8xf32> to vector<8x1xf32>
    %49 = vector.broadcast %48 : vector<8x1xf32> to vector<8x128xf32>
    %50 = arith.cmpf oeq, %34, %49 : vector<8x128xf32>
    %c128_i32 = arith.constant 128 : i32
    %51 = vector.broadcast %c128_i32 : i32 to vector<8x128xi32>
    %52 = arith.select %50, %35, %51 : vector<8x128xi1>, vector<8x128xi32>
    %cst_25 = arith.constant dense<2147483647> : vector<8xi32>
    %53 = vector.multi_reduction <minsi>, %52, %cst_25 [1] : vector<8x128xi32> to vector<8xi32>
    %54 = vector.shape_cast %53 : vector<8xi32> to vector<8x1xi32>
    %c4_i32 = arith.constant 4 : i32
    %55 = vector.broadcast %c4_i32 : i32 to vector<8x128xi32>
    %56 = arith.cmpi eq, %35, %55 : vector<8x128xi32>
    %57 = vector.shape_cast %46 : vector<8x1xf32> to vector<8x1xf32>
    %58 = vector.broadcast %57 : vector<8x1xf32> to vector<8x128xf32>
    %59 = arith.select %56, %58, %34 : vector<8x128xi1>, vector<8x128xf32>
    %c5_i32 = arith.constant 5 : i32
    %60 = vector.broadcast %c5_i32 : i32 to vector<8x128xi32>
    %61 = arith.cmpi eq, %35, %60 : vector<8x128xi32>
    %62 = vector.shape_cast %48 : vector<8x1xf32> to vector<8x1xf32>
    %63 = vector.broadcast %62 : vector<8x1xf32> to vector<8x128xf32>
    %64 = arith.select %61, %63, %59 : vector<8x128xi1>, vector<8x128xf32>
    %c6_i32 = arith.constant 6 : i32
    %65 = vector.broadcast %c6_i32 : i32 to vector<8x128xi32>
    %66 = arith.cmpi eq, %35, %65 : vector<8x128xi32>
    %67 = arith.sitofp %54 : vector<8x1xi32> to vector<8x1xf32>
    %68 = vector.shape_cast %67 : vector<8x1xf32> to vector<8x1xf32>
    %69 = vector.broadcast %68 : vector<8x1xf32> to vector<8x128xf32>
    %70 = arith.select %66, %69, %64 : vector<8x128xi1>, vector<8x128xf32>
    %c0_26 = arith.constant 0 : index
    %c0_27 = arith.constant 0 : index
    %71 = vector.load %arg6[%c0_26, %c0_27] : memref<8x128xf32, #tpu.memory_space<vmem>>, vector<8x128xf32>
    tpu.vector_store %arg6[%c0_26, %c0_27], %70 {strides = array<i32>} : memref<8x128xf32, #tpu.memory_space<vmem>>, vector<8x128xf32>,
    return
  }
  func.func @transform_0(%arg0: i32) -> (i32, i32, i32) {
    %c0_i32 = arith.constant 0 : i32
    %c0_i32_0 = arith.constant 0 : i32
    %c0_i32_1 = arith.constant 0 : i32
    return %arg0, %c0_i32, %c0_i32_0 : i32, i32, i32
  }
  func.func @transform_1(%arg0: i32) -> (i32, i32, i32, i32) {
    %c0_i32 = arith.constant 0 : i32
    %c0_i32_0 = arith.constant 0 : i32
    %c0_i32_1 = arith.constant 0 : i32
    %c0_i32_2 = arith.constant 0 : i32
    return %c0_i32, %arg0, %c0_i32_0, %c0_i32_1 : i32, i32, i32, i32
  }
  func.func @transform_2(%arg0: i32) -> (i32, i32) {
    %c0_i32 = arith.constant 0 : i32
    %c0_i32_0 = arith.constant 0 : i32
    %c0_i32_1 = arith.constant 0 : i32
    return %c0_i32, %c0_i32_0 : i32, i32
  }
  func.func @transform_3(%arg0: i32) -> (i32, i32) {
    %c0_i32 = arith.constant 0 : i32
    %c0_i32_0 = arith.constant 0 : i32
    %c0_i32_1 = arith.constant 0 : i32
    return %c0_i32, %c0_i32_0 : i32, i32
  }
  func.func @transform_4(%arg0: i32) -> (i32, i32) {
    %c0_i32 = arith.constant 0 : i32
    %c0_i32_0 = arith.constant 0 : i32
    return %arg0, %c0_i32 : i32, i32
  }
  func.func @transform_5(%arg0: i32) -> (i32, i32) {
    %c0_i32 = arith.constant 0 : i32
    %c0_i32_0 = arith.constant 0 : i32
    return %arg0, %c0_i32 : i32, i32
  }
}

</mosaic_0001>

<llo_original>
// kernel: tpu_custom_call.1
$region0: #{tpu_custom_call.1}
  #allocation0 [shape = 'u32[]', space=smem, size = 0x4, offset = 0x4, fixed_abs, tag = 'smem constant byte address 0x4 - core index']
  #allocation1 [shape = 'u32[144,128]{1,0:T(1,128)}', space=vmem, size = 0x12000, scoped, tag = 'internal scratch']
  %s0 = inlined_call_operand.vmem [shape: bf16[8,8,32], index: 0, kind: input, shape index: {}]
  %s1 = inlined_call_operand.vmem [shape: f32[3,8,8,1], index: 1, kind: input, shape index: {}]
  %s2 = inlined_call_operand.vmem [shape: f32[96,128], index: 2, kind: input, shape index: {}]
  %s3 = inlined_call_operand.vmem [shape: f32[1,128], index: 3, kind: input, shape index: {}]
  %s4 = inlined_call_operand.vmem [shape: s32[8,1], index: 4, kind: input, shape index: {}]
  %s5 = inlined_call_operand.hbm [shape: f32[8,128], index: 5, kind: output, shape index: {}]
  %s6 = sld [smem:[#allocation0]]
  $region30: #{tpu_custom_call.1} parent=0
    _
  %s8 = ssub.s32 1, %s6
  %s9 = scalar_select 0, %s8, %s6
  $region1: #{tpu_custom_call.1} parent=0
    #allocation2 [shape = 'u8[4096]{0}', space=vmem, size = 0x1000, scoped, tag = 'output window, operand 0, single buffered']
    #allocation3 [shape = 's32[1]{0}', space=sflag, size = 0x4, scoped, tag = 'scoped memory for tpu_custom_call.1']
    %10 = vsyncpa [#allocation3], 0
    // Predicated region
    $region2: #{tpu_custom_call.1} parent=1 // pred_check
      _
    $region3: #{tpu_custom_call.1} parent=1 // pred_check_branch
      %12 = sbr.rel (0) target = $region5
    $region4: #{tpu_custom_call.1} parent=1 // pred_region
      _
    $region5: #{tpu_custom_call.1} parent=1 // pred_fallthru
      _
    // Predicated region
    $region6: #{tpu_custom_call.1} parent=1 // pred_check
      _
    $region7: #{tpu_custom_call.1} parent=1 // pred_check_branch
      %14 = sbr.rel (0) target = $region9
    $region8: #{tpu_custom_call.1} parent=1 // pred_region
      _
    $region9: #{tpu_custom_call.1} parent=1 // pred_fallthru
      _
    // Predicated region
    $region10: #{tpu_custom_call.1} parent=1 // pred_check
      _
    $region11: #{tpu_custom_call.1} parent=1 // pred_check_branch
      %16 = sbr.rel (0) target = $region13
    $region12: #{tpu_custom_call.1} parent=1 // pred_region
      _
    $region13: #{tpu_custom_call.1} parent=1 // pred_fallthru
      _
    // Predicated region
    $region14: #{tpu_custom_call.1} parent=1 // pred_check
      _
    $region15: #{tpu_custom_call.1} parent=1 // pred_check_branch
      %18 = sbr.rel (0) target = $region17
    $region16: #{tpu_custom_call.1} parent=1 // pred_region
      _
    $region17: #{tpu_custom_call.1} parent=1 // pred_fallthru
      _
    // Predicated region
    $region18: #{tpu_custom_call.1} parent=1 // pred_check
      _
    $region19: #{tpu_custom_call.1} parent=1 // pred_check_branch
      %20 = sbr.rel (0) target = $region21
    $region20: #{tpu_custom_call.1} parent=1 // pred_region
      _
    $region21: #{tpu_custom_call.1} parent=1 // pred_fallthru
      _
    %v21 = vld [vmem:[%s0] sm:$0xf]
    %v22 = vld [vmem:[%s0 + $0x4] sm:$0xf]
    %v23 = vld [vmem:[%s0 + $0x8] sm:$0xf]
    %v24 = vld [vmem:[%s0 + $0xc] sm:$0xf]
    %v25 = vld [vmem:[%s0 + $0x10] sm:$0xf]
    %v26 = vld [vmem:[%s0 + $0x14] sm:$0xf]
    %v27 = vld [vmem:[%s0 + $0x18] sm:$0xf]
    %v28 = vld [vmem:[%s0 + $0x1c] sm:$0xf]
    %v29 = vunpack.c.l.bf16 %v21
    %v30 = vunpack.c.l.bf16 %v22
    %v31 = vunpack.c.l.bf16 %v23
    %v32 = vunpack.c.l.bf16 %v24
    %v33 = vunpack.c.l.bf16 %v25
    %v34 = vunpack.c.l.bf16 %v26
    %v35 = vunpack.c.l.bf16 %v27
    %v36 = vunpack.c.l.bf16 %v28
    %v37 = vld [vmem:[%s1] sm:$0xff]
    %v38 = vld [vmem:[%s1 + $0x8] sm:$0xff]
    %v39 = vld [vmem:[%s1 + $0x10] sm:$0xff]
    %v40 = vld [vmem:[%s1 + $0x18] sm:$0xff]
    %v41 = vld [vmem:[%s1 + $0x20] sm:$0xff]
    %v42 = vld [vmem:[%s1 + $0x28] sm:$0xff]
    %v43 = vld [vmem:[%s1 + $0x30] sm:$0xff]
    %v44 = vld [vmem:[%s1 + $0x38] sm:$0xff]
    %46 = vset.pattern.permute.xlu0 0
    %47 = vperm.xlu0 %46, %v37
    %v48 = vpop.permute.xlu0 %47
    %51 = vset.pattern.permute.xlu0 0
    %52 = vperm.xlu0 %51, %v38
    %v53 = vpop.permute.xlu0 %52
    %56 = vset.pattern.permute.xlu0 0
    %57 = vperm.xlu0 %56, %v39
    %v58 = vpop.permute.xlu0 %57
    %61 = vset.pattern.permute.xlu0 0
    %62 = vperm.xlu0 %61, %v40
    %v63 = vpop.permute.xlu0 %62
    %66 = vset.pattern.permute.xlu0 0
    %67 = vperm.xlu0 %66, %v41
    %v68 = vpop.permute.xlu0 %67
    %71 = vset.pattern.permute.xlu0 0
    %72 = vperm.xlu0 %71, %v42
    %v73 = vpop.permute.xlu0 %72
    %76 = vset.pattern.permute.xlu0 0
    %77 = vperm.xlu0 %76, %v43
    %v78 = vpop.permute.xlu0 %77
    %81 = vset.pattern.permute.xlu0 0
    %82 = vperm.xlu0 %81, %v44
    %v83 = vpop.permute.xlu0 %82
    %v85 = vmul.f32 %v29, %v48
    %v86 = vmul.f32 %v30, %v53
    %v87 = vmul.f32 %v31, %v58
    %v88 = vmul.f32 %v32, %v63
    %v89 = vmul.f32 %v33, %v68
    %v90 = vmul.f32 %v34, %v73
    %v91 = vmul.f32 %v35, %v78
    %v92 = vmul.f32 %v36, %v83
    %vm93 = vcmask 261120
    %v94 = vsel %vm93, %v85, -inf
    %v95 = vrot.slane %v94, 4
    %v96 = vmax.f32 %v94, %v95
    %v97 = vrot.slane %v96, 2
    %v98 = vmax.f32 %v96, %v97
    %v99 = vrot.slane %v98, 1
    %v100 = vmax.f32 %v98, %v99
    %v101 = vsel %vm93, %v86, -inf
    %v102 = vrot.slane %v101, 4
    %v103 = vmax.f32 %v101, %v102
    %v104 = vrot.slane %v103, 2
    %v105 = vmax.f32 %v103, %v104
    %v106 = vrot.slane %v105, 1
    %v107 = vmax.f32 %v105, %v106
    %v108 = vsel %vm93, %v87, -inf
    %v109 = vrot.slane %v108, 4
    %v110 = vmax.f32 %v108, %v109
    %v111 = vrot.slane %v110, 2
    %v112 = vmax.f32 %v110, %v111
    %v113 = vrot.slane %v112, 1
    %v114 = vmax.f32 %v112, %v113
    %v115 = vsel %vm93, %v88, -inf
    %v116 = vrot.slane %v115, 4
    %v117 = vmax.f32 %v115, %v116
    %v118 = vrot.slane %v117, 2
    %v119 = vmax.f32 %v117, %v118
    %v120 = vrot.slane %v119, 1
    %v121 = vmax.f32 %v119, %v120
    %v122 = vsel %vm93, %v89, -inf
    %v123 = vrot.slane %v122, 4
    %v124 = vmax.f32 %v122, %v123
    %v125 = vrot.slane %v124, 2
    %v126 = vmax.f32 %v124, %v125
    %v127 = vrot.slane %v126, 1
    %v128 = vmax.f32 %v126, %v127
    %v129 = vsel %vm93, %v90, -inf
    %v130 = vrot.slane %v129, 4
    %v131 = vmax.f32 %v129, %v130
    %v132 = vrot.slane %v131, 2
    %v133 = vmax.f32 %v131, %v132
    %v134 = vrot.slane %v133, 1
    %v135 = vmax.f32 %v133, %v134
    %v136 = vsel %vm93, %v91, -inf
    %v137 = vrot.slane %v136, 4
    %v138 = vmax.f32 %v136, %v137
    %v139 = vrot.slane %v138, 2
    %v140 = vmax.f32 %v138, %v139
    %v141 = vrot.slane %v140, 1
    %v142 = vmax.f32 %v140, %v141
    %v143 = vsel %vm93, %v92, -inf
    %v144 = vrot.slane %v143, 4
    %v145 = vmax.f32 %v143, %v144
    %v146 = vrot.slane %v145, 2
    %v147 = vmax.f32 %v145, %v146
    %v148 = vrot.slane %v147, 1
    %v149 = vmax.f32 %v147, %v148
    %v150 = vtanh.pop %v100
    %v151 = vtanh.pop %v107
    %v152 = vtanh.pop %v114
    %v153 = vtanh.pop %v121
    %v154 = vtanh.pop %v128
    %v155 = vtanh.pop %v135
    %v156 = vtanh.pop %v142
    %v157 = vtanh.pop %v149
    %s158 = scalar_lea.vmem %s1, 64
    %v159 = vld [vmem:[%s158] sm:$0xff]
    %v160 = vld [vmem:[%s158 + $0x8] sm:$0xff]
    %v161 = vld [vmem:[%s158 + $0x10] sm:$0xff]
    %v162 = vld [vmem:[%s158 + $0x18] sm:$0xff]
    %v163 = vld [vmem:[%s158 + $0x20] sm:$0xff]
    %v164 = vld [vmem:[%s158 + $0x28] sm:$0xff]
    %v165 = vld [vmem:[%s158 + $0x30] sm:$0xff]
    %v166 = vld [vmem:[%s158 + $0x38] sm:$0xff]
    %168 = vset.pattern.permute.xlu0 0
    %169 = vperm.xlu0 %168, %v159
    %v170 = vpop.permute.xlu0 %169
    %173 = vset.pattern.permute.xlu0 0
    %174 = vperm.xlu0 %173, %v160
    %v175 = vpop.permute.xlu0 %174
    %178 = vset.pattern.permute.xlu0 0
    %179 = vperm.xlu0 %178, %v161
    %v180 = vpop.permute.xlu0 %179
    %183 = vset.pattern.permute.xlu0 0
    %184 = vperm.xlu0 %183, %v162
    %v185 = vpop.permute.xlu0 %184
    %188 = vset.pattern.permute.xlu0 0
    %189 = vperm.xlu0 %188, %v163
    %v190 = vpop.permute.xlu0 %189
    %193 = vset.pattern.permute.xlu0 0
    %194 = vperm.xlu0 %193, %v164
    %v195 = vpop.permute.xlu0 %194
    %198 = vset.pattern.permute.xlu0 0
    %199 = vperm.xlu0 %198, %v165
    %v200 = vpop.permute.xlu0 %199
    %203 = vset.pattern.permute.xlu0 0
    %204 = vperm.xlu0 %203, %v166
    %v205 = vpop.permute.xlu0 %204
    %v207 = vmul.f32 %v29, %v170
    %v208 = vmul.f32 %v30, %v175
    %v209 = vmul.f32 %v31, %v180
    %v210 = vmul.f32 %v32, %v185
    %v211 = vmul.f32 %v33, %v190
    %v212 = vmul.f32 %v34, %v195
    %v213 = vmul.f32 %v35, %v200
    %v214 = vmul.f32 %v36, %v205
    %v215 = vsel %vm93, %v207, -inf
    %v216 = vrot.slane %v215, 4
    %v217 = vmax.f32 %v215, %v216
    %v218 = vrot.slane %v217, 2
    %v219 = vmax.f32 %v217, %v218
    %v220 = vrot.slane %v219, 1
    %v221 = vmax.f32 %v219, %v220
    %v222 = vsel %vm93, %v208, -inf
    %v223 = vrot.slane %v222, 4
    %v224 = vmax.f32 %v222, %v223
    %v225 = vrot.slane %v224, 2
    %v226 = vmax.f32 %v224, %v225
    %v227 = vrot.slane %v226, 1
    %v228 = vmax.f32 %v226, %v227
    %v229 = vsel %vm93, %v209, -inf
    %v230 = vrot.slane %v229, 4
    %v231 = vmax.f32 %v229, %v230
    %v232 = vrot.slane %v231, 2
    %v233 = vmax.f32 %v231, %v232
    %v234 = vrot.slane %v233, 1
    %v235 = vmax.f32 %v233, %v234
    %v236 = vsel %vm93, %v210, -inf
    %v237 = vrot.slane %v236, 4
    %v238 = vmax.f32 %v236, %v237
    %v239 = vrot.slane %v238, 2
    %v240 = vmax.f32 %v238, %v239
    %v241 = vrot.slane %v240, 1
    %v242 = vmax.f32 %v240, %v241
    %v243 = vsel %vm93, %v211, -inf
    %v244 = vrot.slane %v243, 4
    %v245 = vmax.f32 %v243, %v244
    %v246 = vrot.slane %v245, 2
    %v247 = vmax.f32 %v245, %v246
    %v248 = vrot.slane %v247, 1
    %v249 = vmax.f32 %v247, %v248
    %v250 = vsel %vm93, %v212, -inf
    %v251 = vrot.slane %v250, 4
    %v252 = vmax.f32 %v250, %v251
    %v253 = vrot.slane %v252, 2
    %v254 = vmax.f32 %v252, %v253
    %v255 = vrot.slane %v254, 1
    %v256 = vmax.f32 %v254, %v255
    %v257 = vsel %vm93, %v213, -inf
    %v258 = vrot.slane %v257, 4
    %v259 = vmax.f32 %v257, %v258
    %v260 = vrot.slane %v259, 2
    %v261 = vmax.f32 %v259, %v260
    %v262 = vrot.slane %v261, 1
    %v263 = vmax.f32 %v261, %v262
    %v264 = vsel %vm93, %v214, -inf
    %v265 = vrot.slane %v264, 4
    %v266 = vmax.f32 %v264, %v265
    %v267 = vrot.slane %v266, 2
    %v268 = vmax.f32 %v266, %v267
    %v269 = vrot.slane %v268, 1
    %v270 = vmax.f32 %v268, %v269
    %v271 = vtanh.pop %v221
    %v272 = vtanh.pop %v228
    %v273 = vtanh.pop %v235
    %v274 = vtanh.pop %v242
    %v275 = vtanh.pop %v249
    %v276 = vtanh.pop %v256
    %v277 = vtanh.pop %v263
    %v278 = vtanh.pop %v270
    %s279 = scalar_lea.vmem %s1, 128
    %v280 = vld [vmem:[%s279] sm:$0xff]
    %v281 = vld [vmem:[%s279 + $0x8] sm:$0xff]
    %v282 = vld [vmem:[%s279 + $0x10] sm:$0xff]
    %v283 = vld [vmem:[%s279 + $0x18] sm:$0xff]
    %v284 = vld [vmem:[%s279 + $0x20] sm:$0xff]
    %v285 = vld [vmem:[%s279 + $0x28] sm:$0xff]
    %v286 = vld [vmem:[%s279 + $0x30] sm:$0xff]
    %v287 = vld [vmem:[%s279 + $0x38] sm:$0xff]
    %289 = vset.pattern.permute.xlu0 0
    %290 = vperm.xlu0 %289, %v280
    %v291 = vpop.permute.xlu0 %290
    %294 = vset.pattern.permute.xlu0 0
    %295 = vperm.xlu0 %294, %v281
    %v296 = vpop.permute.xlu0 %295
    %299 = vset.pattern.permute.xlu0 0
    %300 = vperm.xlu0 %299, %v282
    %v301 = vpop.permute.xlu0 %300
    %304 = vset.pattern.permute.xlu0 0
    %305 = vperm.xlu0 %304, %v283
    %v306 = vpop.permute.xlu0 %305
    %309 = vset.pattern.permute.xlu0 0
    %310 = vperm.xlu0 %309, %v284
    %v311 = vpop.permute.xlu0 %310
    %314 = vset.pattern.permute.xlu0 0
    %315 = vperm.xlu0 %314, %v285
    %v316 = vpop.permute.xlu0 %315
    %319 = vset.pattern.permute.xlu0 0
    %320 = vperm.xlu0 %319, %v286
    %v321 = vpop.permute.xlu0 %320
    %324 = vset.pattern.permute.xlu0 0
    %325 = vperm.xlu0 %324, %v287
    %v326 = vpop.permute.xlu0 %325
    %v328 = vmul.f32 %v29, %v291
    %v329 = vmul.f32 %v30, %v296
    %v330 = vmul.f32 %v31, %v301
    %v331 = vmul.f32 %v32, %v306
    %v332 = vmul.f32 %v33, %v311
    %v333 = vmul.f32 %v34, %v316
    %v334 = vmul.f32 %v35, %v321
    %v335 = vmul.f32 %v36, %v326
    %v336 = vsel %vm93, %v328, -inf
    %v337 = vrot.slane %v336, 4
    %v338 = vmax.f32 %v336, %v337
    %v339 = vrot.slane %v338, 2
    %v340 = vmax.f32 %v338, %v339
    %v341 = vrot.slane %v340, 1
    %v342 = vmax.f32 %v340, %v341
    %v343 = vsel %vm93, %v329, -inf
    %v344 = vrot.slane %v343, 4
    %v345 = vmax.f32 %v343, %v344
    %v346 = vrot.slane %v345, 2
    %v347 = vmax.f32 %v345, %v346
    %v348 = vrot.slane %v347, 1
    %v349 = vmax.f32 %v347, %v348
    %v350 = vsel %vm93, %v330, -inf
    %v351 = vrot.slane %v350, 4
    %v352 = vmax.f32 %v350, %v351
    %v353 = vrot.slane %v352, 2
    %v354 = vmax.f32 %v352, %v353
    %v355 = vrot.slane %v354, 1
    %v356 = vmax.f32 %v354, %v355
    %v357 = vsel %vm93, %v331, -inf
    %v358 = vrot.slane %v357, 4
    %v359 = vmax.f32 %v357, %v358
    %v360 = vrot.slane %v359, 2
    %v361 = vmax.f32 %v359, %v360
    %v362 = vrot.slane %v361, 1
    %v363 = vmax.f32 %v361, %v362
    %v364 = vsel %vm93, %v332, -inf
    %v365 = vrot.slane %v364, 4
    %v366 = vmax.f32 %v364, %v365
    %v367 = vrot.slane %v366, 2
    %v368 = vmax.f32 %v366, %v367
    %v369 = vrot.slane %v368, 1
    %v370 = vmax.f32 %v368, %v369
    %v371 = vsel %vm93, %v333, -inf
    %v372 = vrot.slane %v371, 4
    %v373 = vmax.f32 %v371, %v372
    %v374 = vrot.slane %v373, 2
    %v375 = vmax.f32 %v373, %v374
    %v376 = vrot.slane %v375, 1
    %v377 = vmax.f32 %v375, %v376
    %v378 = vsel %vm93, %v334, -inf
    %v379 = vrot.slane %v378, 4
    %v380 = vmax.f32 %v378, %v379
    %v381 = vrot.slane %v380, 2
    %v382 = vmax.f32 %v380, %v381
    %v383 = vrot.slane %v382, 1
    %v384 = vmax.f32 %v382, %v383
    %v385 = vsel %vm93, %v335, -inf
    %v386 = vrot.slane %v385, 4
    %v387 = vmax.f32 %v385, %v386
    %v388 = vrot.slane %v387, 2
    %v389 = vmax.f32 %v387, %v388
    %v390 = vrot.slane %v389, 1
    %v391 = vmax.f32 %v389, %v390
    %v392 = vtanh.pop %v342
    %v393 = vtanh.pop %v349
    %v394 = vtanh.pop %v356
    %v395 = vtanh.pop %v363
    %v396 = vtanh.pop %v370
    %v397 = vtanh.pop %v377
    %v398 = vtanh.pop %v384
    %v399 = vtanh.pop %v391
    %vm408 = vcmask 1041409
    %v409 = vsel %vm408, %v151, %v150
    %vm410 = vcmask 1042434
    %v411 = vsel %vm410, %v152, %v409
    %vm412 = vcmask 1043459
    %v413 = vsel %vm412, %v153, %v411
    %vm414 = vcmask 1044484
    %v415 = vsel %vm414, %v154, %v413
    %vm416 = vcmask 1045509
    %v417 = vsel %vm416, %v155, %v415
    %vm418 = vcmask 1046534
    %v419 = vsel %vm418, %v156, %v417
    %vm420 = vcmask 1047559
    %v421 = vsel %vm420, %v157, %v419
    %v431 = vsel %vm408, %v272, %v271
    %v432 = vsel %vm410, %v273, %v431
    %v433 = vsel %vm412, %v274, %v432
    %v434 = vsel %vm414, %v275, %v433
    %v435 = vsel %vm416, %v276, %v434
    %v436 = vsel %vm418, %v277, %v435
    %v437 = vsel %vm420, %v278, %v436
    %438 = vrot.lane.b32.xlu0 %v437, 32
    %v439 = vpop.permute.xlu0 %438
    %v449 = vsel %vm408, %v393, %v392
    %v450 = vsel %vm410, %v394, %v449
    %v451 = vsel %vm412, %v395, %v450
    %v452 = vsel %vm414, %v396, %v451
    %v453 = vsel %vm416, %v397, %v452
    %v454 = vsel %vm418, %v398, %v453
    %v455 = vsel %vm420, %v399, %v454
    %456 = vrot.lane.b32.xlu0 %v455, 64
    %v457 = vpop.permute.xlu0 %456
    %v459 = vsel %vm93, %v421, %v439
    %vm460 = vcmask 523264
    %v461 = vsel %vm460, %v459, %v457
    %v462 = vld [vmem:[%s2] sm:$0xff]
    %v463 = vld [vmem:[%s2 + $0x8] sm:$0xff]
    %v464 = vld [vmem:[%s2 + $0x10] sm:$0xff]
    %v465 = vld [vmem:[%s2 + $0x18] sm:$0xff]
    %v466 = vld [vmem:[%s2 + $0x20] sm:$0xff]
    %v467 = vld [vmem:[%s2 + $0x28] sm:$0xff]
    %v468 = vld [vmem:[%s2 + $0x30] sm:$0xff]
    %v469 = vld [vmem:[%s2 + $0x38] sm:$0xff]
    %v470 = vld [vmem:[%s2 + $0x40] sm:$0xff]
    %v471 = vld [vmem:[%s2 + $0x48] sm:$0xff]
    %v472 = vld [vmem:[%s2 + $0x50] sm:$0xff]
    %v473 = vld [vmem:[%s2 + $0x58] sm:$0xff]
    %v474 = vld [vmem:[%s3] sm:$0x1]
    %v476 = vlaneseq
    %v477 = vshrl.u32 %v476, 7
    %v478 = vsub.s32 0, %v477
    %v479 = vrot.slane %v474, %v478
    %vm481 = vcmask 785408
    %v483 = vsel %vm481, %v461, 0
    %485 = vmatprep.subr.mxu0 0.0
    %486 = vmatpush1.msra.mxu0 %v462
    %487 = vmatprep.subr.mxu0 0.0
    %488 = vmatpush1.msra.mxu0 %v463
    %489 = vmatprep.subr.mxu0 0.0
    %490 = vmatpush1.msra.mxu0 %v464
    %491 = vmatprep.subr.mxu0 0.0
    %492 = vmatpush1.msra.mxu0 %v465
    %493 = vmatprep.subr.mxu0 0.0
    %494 = vmatpush1.msra.mxu0 %v466
    %495 = vmatprep.subr.mxu0 0.0
    %496 = vmatpush1.msra.mxu0 %v467
    %497 = vmatprep.subr.mxu0 0.0
    %498 = vmatpush1.msra.mxu0 %v468
    %499 = vmatprep.subr.mxu0 0.0
    %500 = vmatpush1.msra.mxu0 %v469
    %501 = vmatprep.subr.mxu0 0.0
    %502 = vmatpush1.msra.mxu0 %v470
    %503 = vmatprep.subr.mxu0 0.0
    %504 = vmatpush1.msra.mxu0 %v471
    %505 = vmatprep.subr.mxu0 0.0
    %506 = vmatpush1.msra.mxu0 %v472
    %507 = vmatprep.subr.mxu0 0.0
    %508 = vmatpush1.msra.mxu0 %v473
    %509 = vmatprep.subr.mxu0 0.0
    %510 = vmatpush1.msra.mxu0 0.0
    %511 = vmatprep.subr.mxu0 0.0
    %512 = vmatpush1.msra.mxu0 0.0
    %513 = vmatprep.subr.mxu0 0.0
    %514 = vmatpush1.msra.mxu0 0.0
    %515 = vmatprep.subr.mxu0 0.0
    %516 = vmatpush1.msra.mxu0 0.0
    %517 = vmatprep.subr.mxu0 0.0
    %518 = vmatpush1.msra.mxu0 0.0
    %519 = vmatprep.subr.mxu0 0.0
    %520 = vmatpush1.msra.mxu0 0.0
    %521 = vmatprep.subr.mxu0 0.0
    %522 = vmatpush1.msra.mxu0 0.0
    %523 = vmatprep.subr.mxu0 0.0
    %524 = vmatpush1.msra.mxu0 0.0
    %525 = vmatprep.subr.mxu0 0.0
    %526 = vmatpush1.msra.mxu0 0.0
    %527 = vmatprep.subr.mxu0 0.0
    %528 = vmatpush1.msra.mxu0 0.0
    %529 = vmatprep.subr.mxu0 0.0
    %530 = vmatpush1.msra.mxu0 0.0
    %531 = vmatprep.subr.mxu0 0.0
    %532 = vmatpush1.msra.mxu0 0.0
    %533 = vmatprep.subr.mxu0 0.0
    %534 = vmatpush1.msra.mxu0 0.0
    %535 = vmatprep.subr.mxu0 0.0
    %536 = vmatpush1.msra.mxu0 0.0
    %537 = vmatprep.subr.mxu0 0.0
    %538 = vmatpush1.msra.mxu0 0.0
    %539 = vmatprep.subr.mxu0 0.0
    %540 = vmatpush1.msra.mxu0 0.0
    %541 = vmatprep.subr.mxu0 0.0
    %542 = vmatpush1.msra.mxu0 0.0
    %543 = vmatprep.subr.mxu0 0.0
    %544 = vmatpush1.msra.mxu0 0.0
    %545 = vmatprep.subr.mxu0 0.0
    %546 = vmatpush1.msra.mxu0 0.0
    %547 = vmatprep.subr.mxu0 0.0
    %548 = vmatpush1.msra.mxu0 0.0
    %549 = vmatprep.mubr.f32.mxu0 0.0
    %550 = vmatmul.mubr.f32.gmra.mrb[0].mxu0 %v483
    %v551 = vpop.f32.mrb[0].mxu0
    %v552 = vadd.f32 %v479, %v551
    %v553 = vpop.f32.mrb[0].mxu0
    %554 = vdwg.mxu0
    %555 = vmax.xlane.f32.xlu0 %v552
    %v556 = vpop.xlane.xlu0 %555
    %v557 = vsub.f32 %v552, %v556
    %v558 = vmul.f32 %v557, 1.442695
    %v559 = vpow.pop %v558
    %560 = vadd.xlane.f32.xlu0 %v559
    %v561 = vpop.xlane.xlu0 %560
    %v562 = vrcp.pop %v561
    %v563 = vmul.f32 %v559, %v562
    %v564 = vlaneseq
    %v565 = vand.u32 %v564, 127
    %v566 = vld [vmem:[%s4] sm:$0xff]
    %567 = vset.pattern.permute.xlu0 0
    %568 = vperm.xlu0 %567, %v566
    %v569 = vpop.permute.xlu0 %568
    %vm570 = vcmp.eq.s32.totalorder %v565, %v569
    %v571 = vsel %vm570, 1, 0
    %v572 = vcvt.s32.f32 %v571
    %v573 = vmul.f32 %v552, %v572
    %574 = vadd.xlane.f32.xlu0 %v573
    %v575 = vpop.xlane.xlu0 %574
    %v576 = vlog2.pop %v561
    %v577 = vmul.f32 %v576, 0.6931472
    %v578 = vadd.f32 %v556, %v577
    %v579 = vsub.f32 %v578, %v575
    %580 = vmax.xlane.f32.xlu0 %v563
    %v581 = vpop.xlane.xlu0 %580
    %vm582 = vcmp.eq.f32.partialorder %v563, %v581
    %v583 = vsel %vm582, %v565, 128
    %v584 = vand.u32 %v583, 65535
    %v585 = vshra.s32 %v583, 16
    %v586 = vcvt.s32.f32 %v584
    %v587 = vcvt.s32.f32 %v585
    %588 = vmin.xlane.f32.xlu0 %v587
    %v589 = vpop.xlane.xlu0 %588
    %vm590 = vcmp.eq.f32.partialorder %v587, %v589
    %v591 = vsel %vm590, %v586, inf
    %592 = vmin.xlane.f32.xlu0 %v591
    %v593 = vpop.xlane.xlu0 %592
    %v594 = vcvt.f32.s32 %v593
    %v595 = vcvt.f32.s32 %v589
    %v596 = vshll.u32 %v595, 16
    %v597 = vadd.s32 %v596, %v594
    %vm598 = vcmp.eq.s32.totalorder %v565, 4
    %v599 = vsel %vm598, %v579, %v563
    %vm600 = vcmp.eq.s32.totalorder %v565, 5
    %v601 = vsel %vm600, %v581, %v599
    %vm602 = vcmp.eq.s32.totalorder %v565, 6
    %v603 = vcvt.s32.f32 %v597
    %v604 = vsel %vm602, %v603, %v601
    %605 = vst [vmem:[#allocation2] sm:$0xff] %v604
    // Predicated region
    $region22: #{tpu_custom_call.1} parent=1 // pred_check
      _
    $region23: #{tpu_custom_call.1} parent=1 // pred_check_branch
      %607 = sbr.rel (0) target = $region25
    $region24: #{tpu_custom_call.1} parent=1 // pred_region
      %s609 = ssub.s32 128, 128
      %610 = vsyncadd [#allocation3], %s609
      %s612 = sshll.u32 [#allocation2], 4
      %s613 = int_to_ptr.vmem [resolvable:$true] %s612
      %615 = dma.vmem_to_hbm [thread:$0]  %s613, 128, %s5, [#allocation3]
    $region25: #{tpu_custom_call.1} parent=1 // pred_fallthru
      _
    // Predicated region
    $region26: #{tpu_custom_call.1} parent=1 // pred_check
      _
    $region27: #{tpu_custom_call.1} parent=1 // pred_check_branch
      %617 = sbr.rel (0) target = $region29
    $region28: #{tpu_custom_call.1} parent=1 // pred_region
      %618 = dma.done [#allocation3], 128
    $region29: #{tpu_custom_call.1} parent=1 // pred_fallthru
      _
    %619 = vsyncpa [#allocation3], 1

</llo_original>
